<compile_context>
chip_gen: v7x
topology: tpu7x:2x2x1
jax: 0.10.0
libtpu: 0.0.40
codegen_flags: <defaults>
</compile_context>

<pallas_src>
import functools

import jax
import jax.numpy as jnp
from jax.experimental import pallas as pl
from jax.experimental.pallas import tpu as pltpu


def _round_up(x, m):
    return (x + m - 1) // m * m


def _cdiv(a, b):
    return (a + b - 1) // b


def _default_vmem_budget():
    """Generation-aware budget: ~3/4 of physical VMEM.

    ~96 MiB on v5e/v6e (128 MiB VMEM), ~48 MiB on v7x (64 MiB VMEM).
    """
    try:
        cap = getattr(pltpu.get_tpu_info(), "vmem_capacity_bytes", None)
    except Exception:
        cap = None
    if not cap:
        cap = 64 << 20  # conservative fallback (v7x-sized)
    return (int(cap) * 3) // 4


def _pick_tile(raw_cols, s_true):
    """Pick a lane-aligned S tile width. Returns (tile_cols, num_tiles).

    If one tile covers all of S, use the exact (possibly non-128-multiple) full
    extent: block_shape == full array dim is exempt from the (8,128) rule, so
    no host-side padding of x is ever needed.
    """
    s_pad = _round_up(s_true, 128)
    ts = max(128, (int(raw_cols) // 128) * 128)
    ts = min(ts, s_pad)
    if ts >= s_true:
        return s_true, 1
    return ts, _cdiv(s_true, ts)


# ---------------------------------------------------------------------------
# Kernels
# ---------------------------------------------------------------------------

def _excite_gate(m, w1_ref, b1_ref, w2_ref, b2_ref, out_dtype):
    """1x1x1-conv bottleneck excite + sigmoid. m: (C, 1) f32 channel means."""
    h = jnp.dot(w1_ref[...], m, preferred_element_type=jnp.float32) + b1_ref[...]
    h = jnp.maximum(h, 0.0)                                           # (Cmid, 1)
    y = jnp.dot(w2_ref[...], h, preferred_element_type=jnp.float32) + b2_ref[...]
    return jax.nn.sigmoid(y).astype(out_dtype)                        # (C, 1)


def _ge_stream_kernel(x_ref, w1_ref, b1_ref, w2_ref, b2_ref, o_ref, acc_ref,
                      *, inv_s, ts, s_true, num_tiles):
    """Path A: single-read streaming.

    x arrives in (C, ts) tiles along the inner 'arbitrary' grid axis. Each tile
    is summed into an f32 channel accumulator and copied into the resident
    (C, S) output slab; on the last tile the excite gate is computed and the
    whole slab is rescaled in the native dtype."""
    s_idx = pl.program_id(1)

    @pl.when(s_idx == 0)
    def _():
        acc_ref[...] = jnp.zeros_like(acc_ref)

    start = s_idx * ts
    if ts % 128 == 0:
        start = pl.multiple_of(start, 128)
    tail = s_true - (num_tiles - 1) * ts          # python int in [1, ts]

    def consume(width):
        xt = x_ref[0, :, :width]                  # (C, width), native dtype, valid cols
        acc_ref[...] += jnp.sum(xt.astype(jnp.float32), axis=-1, keepdims=True)
        o_ref[0, :, pl.ds(start, width)] = xt

    if tail == ts:
        consume(ts)
    else:
        @pl.when(s_idx < num_tiles - 1)
        def _():
            consume(ts)

        @pl.when(s_idx == num_tiles - 1)
        def _():
            consume(tail)                          # ragged tail: static width, no garbage

    @pl.when(s_idx == num_tiles - 1)
    def _():
        g = _excite_gate(acc_ref[...] * inv_s, w1_ref, b1_ref, w2_ref, b2_ref,
                         o_ref.dtype)              # gate cast once to x.dtype
        o_ref[0] = o_ref[0] * g                    # broadcast (C,1) over (C,S), native dtype


def _ge_gate_kernel(x_ref, w1_ref, b1_ref, w2_ref, b2_ref, gate_ref, acc_ref,
                    *, inv_s, ts, s_true, num_tiles):
    """Path B, pass 1: accumulate channel sums over S tiles (static-sliced
    ragged tail, so hardware-padded garbage never enters the sum), then
    finalize mean -> excite -> sigmoid gate on the last tile."""
    s_idx = pl.program_id(1)

    @pl.when(s_idx == 0)
    def _():
        acc_ref[...] = jnp.zeros_like(acc_ref)

    tail = s_true - (num_tiles - 1) * ts

    def accumulate(width):
        xt = x_ref[0, :, :width].astype(jnp.float32)
        acc_ref[...] += jnp.sum(xt, axis=-1, keepdims=True)

    if tail == ts:
        accumulate(ts)
    else:
        @pl.when(s_idx < num_tiles - 1)
        def _():
            accumulate(ts)

        @pl.when(s_idx == num_tiles - 1)
        def _():
            accumulate(tail)

    @pl.when(s_idx == num_tiles - 1)
    def _():
        gate_ref[0] = _excite_gate(acc_ref[...] * inv_s, w1_ref, b1_ref,
                                   w2_ref, b2_ref, gate_ref.dtype)


def _ge_scale_kernel(x_ref, gate_ref, o_ref):
    """Path B, pass 2: broadcast-rescale each (C, ts) tile in the native dtype.
    Ragged-tail columns beyond S are discarded on writeback."""
    o_ref[0] = x_ref[0] * gate_ref[0]


# ---------------------------------------------------------------------------
# Wrapper
# ---------------------------------------------------------------------------

def gather_excite(x_ncdhw, w1, b1, w2, b2, *,
                  donate_input=False,
                  vmem_budget_bytes=None,
                  tile_cols=None,
                  force_two_pass=False):
    """GatherExcite forward (extent=0, param_gather=False, param_excite=True).

    x_ncdhw: (N, C, D, H, W); w1: (Cmid, C); b1: (Cmid, 1); w2: (C, Cmid); b2: (C, 1).

    donate_input: set True only if the caller donates x (jax.jit donate_argnums);
      only then is the rescale aliased in place (otherwise XLA would add a
      defensive copy of the un-donated x).
    force_two_pass: route to the two-pass path (useful for N==1 on 2-TC parts,
      where pass 2's fully parallel grid keeps both TensorCores busy).
    """
    N, C, D, H, W = x_ncdhw.shape
    S = D * H * W
    Cmid = w1.shape[0]
    dtype = x_ncdhw.dtype
    itemsize = jnp.dtype(dtype).itemsize
    inv_s = 1.0 / float(S)

    x = x_ncdhw.reshape(N, C, S)                 # contiguous reshape: free
    budget = int(vmem_budget_bytes) if vmem_budget_bytes else _default_vmem_budget()
    vmem_limit = int(min(max(budget, 32 << 20), 128 << 20))

    # Excite params: constant-index blocks, resident in VMEM across the grid.
    weight_specs = [
        pl.BlockSpec((Cmid, C), lambda *a: (0, 0)),
        pl.BlockSpec((Cmid, 1), lambda *a: (0, 0)),
        pl.BlockSpec((C, Cmid), lambda *a: (0, 0)),
        pl.BlockSpec((C, 1), lambda *a: (0, 0)),
    ]
    weight_bytes = 2 * 4 * (Cmid * C + Cmid + C * Cmid + C)
    aliases = {0: 0} if donate_input else {}

    # ---------------- Path A: single-read streaming (2x N*C*S traffic) -------
    slab_bytes = C * _round_up(S, 128) * itemsize
    raw_a = tile_cols if tile_cols is not None else (2 << 20) // max(1, C * itemsize)
    ts_a, nt_a = _pick_tile(raw_a, S)
    # 2x resident output slab (double-buffered across N) + 2x input tile + params.
    need_a = 2 * slab_bytes + 2 * C * ts_a * itemsize + weight_bytes + (4 << 20)

    if (not force_two_pass) and need_a <= budget:
        out = pl.pallas_call(
            functools.partial(_ge_stream_kernel,
                              inv_s=inv_s, ts=ts_a, s_true=S, num_tiles=nt_a),
            out_shape=jax.ShapeDtypeStruct((N, C, S), dtype),
            grid_spec=pltpu.PrefetchScalarGridSpec(
                num_scalar_prefetch=0,
                grid=(N, nt_a),
                in_specs=[pl.BlockSpec((1, C, ts_a), lambda n, s: (n, 0, s))]
                         + weight_specs,
                out_specs=pl.BlockSpec((1, C, S), lambda n, s: (n, 0, 0)),
                scratch_shapes=[pltpu.VMEM((C, 1), jnp.float32)]),
            input_output_aliases=aliases,
            compiler_params=pltpu.CompilerParams(
                dimension_semantics=("parallel", "arbitrary"),
                vmem_limit_bytes=vmem_limit),
            cost_estimate=pl.CostEstimate(
                flops=int(N * (2 * C * S + 4 * C * Cmid)),
                transcendentals=int(N * C),
                bytes_accessed=int(2 * N * C * S * itemsize)),
        )(x, w1, b1, w2, b2)
        return out.reshape(N, C, D, H, W)

    # ---------------- Path B: two-pass S-tiled (3x traffic, bounded VMEM) ----
    raw_b = tile_cols if tile_cols is not None else max(
        128, (budget - (8 << 20)) // max(1, 4 * C * itemsize))
    ts_b, nt_b = _pick_tile(raw_b, S)

    # Pass 1: per-(N, C) sigmoid gate (stored in x.dtype so pass 2 stays native).
    gate = pl.pallas_call(
        functools.partial(_ge_gate_kernel,
                          inv_s=inv_s, ts=ts_b, s_true=S, num_tiles=nt_b),
        out_shape=jax.ShapeDtypeStruct((N, C, 1), dtype),
        grid_spec=pltpu.PrefetchScalarGridSpec(
            num_scalar_prefetch=0,
            grid=(N, nt_b),
            in_specs=[pl.BlockSpec((1, C, ts_b), lambda n, s: (n, 0, s))]
                     + weight_specs,
            out_specs=pl.BlockSpec((1, C, 1), lambda n, s: (n, 0, 0)),
            scratch_shapes=[pltpu.VMEM((C, 1), jnp.float32)]),
        compiler_params=pltpu.CompilerParams(
            dimension_semantics=("parallel", "arbitrary"),
            vmem_limit_bytes=vmem_limit),
        cost_estimate=pl.CostEstimate(
            flops=int(N * (C * S + 4 * C * Cmid)),
            transcendentals=int(N * C),
            bytes_accessed=int(N * C * S * itemsize)),
    )(x, w1, b1, w2, b2)

    # Pass 2: rescale x tile by tile, fully parallel grid (both TCs on v7x).
    out = pl.pallas_call(
        _ge_scale_kernel,
        out_shape=jax.ShapeDtypeStruct((N, C, S), dtype),
        grid_spec=pltpu.PrefetchScalarGridSpec(
            num_scalar_prefetch=0,
            grid=(N, nt_b),
            in_specs=[pl.BlockSpec((1, C, ts_b), lambda n, s: (n, 0, s)),
                      pl.BlockSpec((1, C, 1), lambda n, s: (n, 0, 0))],
            out_specs=pl.BlockSpec((1, C, ts_b), lambda n, s: (n, 0, s))),
        input_output_aliases=aliases,
        compiler_params=pltpu.CompilerParams(
            dimension_semantics=("parallel", "parallel"),
            vmem_limit_bytes=vmem_limit),
        cost_estimate=pl.CostEstimate(
            flops=int(N * C * S),
            transcendentals=0,
            bytes_accessed=int(2 * N * C * S * itemsize)),
    )(x, gate)
    return out.reshape(N, C, D, H, W)


# ---------------------------------------------------------------------------
# Pure-JAX reference mirroring the PyTorch forward (default config).
# ---------------------------------------------------------------------------

def gather_excite_ref(x, w1, b1, w2, b2):
    m = jnp.mean(x, axis=(2, 3, 4))                           # (N, C)
    h = jnp.maximum(m @ w1.T + b1[:, 0], 0.0)                 # (N, Cmid)
    y = h @ w2.T + b2[:, 0]                                   # (N, C)
    s = jax.nn.sigmoid(y)[:, :, None, None, None]             # (N, C, 1, 1, 1)
    return x * s


if __name__ == "__main__":
    reduction = 16
    C = 32
    Cmid = C // reduction

    key = jax.random.PRNGKey(0)
    kx1, kx2, kw1, kb1, kw2, kb2 = jax.random.split(key, 6)

    w1 = jax.random.normal(kw1, (Cmid, C), dtype=jnp.float32) * 0.1
    b1 = jax.random.normal(kb1, (Cmid, 1), dtype=jnp.float32) * 0.1
    w2 = jax.random.normal(kw2, (C, Cmid), dtype=jnp.float32) * 0.1
    b2 = jax.random.normal(kb2, (C, 1), dtype=jnp.float32) * 0.1

    # 1) Lane-aligned spatial size (S = 256): default single-read streaming path.
    x_a = jax.random.normal(kx1, (2, C, 4, 8, 8), dtype=jnp.float32)
    ref_a = gather_excite_ref(x_a, w1, b1, w2, b2)
    out_a = jax.block_until_ready(gather_excite(x_a, w1, b1, w2, b2))
    assert out_a.shape == x_a.shape
    assert jnp.allclose(out_a, ref_a, atol=1e-5, rtol=1e-5)

    # 2) Ragged spatial size (S = 210, no host-side padding): streaming path
    #    with a forced 128-wide tile so the static-sliced tail tile is exercised.
    x_b = jax.random.normal(kx2, (2, C, 5, 6, 7), dtype=jnp.float32)
    ref_b = gather_excite_ref(x_b, w1, b1, w2, b2)
    out_b = jax.block_until_ready(
        gather_excite(x_b, w1, b1, w2, b2, tile_cols=128))
    assert out_b.shape == x_b.shape
    assert jnp.allclose(out_b, ref_b, atol=1e-5, rtol=1e-5)

    # 3) Same ragged shape through the forced two-pass path (large C*S / N==1
    #    on 2-TC fallback): multi-tile reduction + ragged tail + tiled rescale.
    out_c = jax.block_until_ready(
        gather_excite(x_b, w1, b1, w2, b2, force_two_pass=True, tile_cols=128))
    assert jnp.allclose(out_c, ref_b, atol=1e-5, rtol=1e-5)

    # 4) Aligned shape through the two-pass path (exact multi-tile split).
    out_d = jax.block_until_ready(
        gather_excite(x_a, w1, b1, w2, b2, force_two_pass=True, tile_cols=128))
    assert jnp.allclose(out_d, ref_a, atol=1e-5, rtol=1e-5)

    print("KERNEL_OK")
</pallas_src>

<mosaic_0001>
module attributes {stable_mosaic.version = 11 : i64} {
  func.func @_ge_stream_kernel(%arg0: i32, %arg1: i32, %arg2: memref<1x32x256xf32, #tpu.memory_space<vmem>>, %arg3: memref<2x32xf32, #tpu.memory_space<vmem>>, %arg4: memref<2x1xf32, #tpu.memory_space<vmem>>, %arg5: memref<32x2xf32, #tpu.memory_space<vmem>>, %arg6: memref<32x1xf32, #tpu.memory_space<vmem>>, %arg7: memref<1x32x256xf32, #tpu.memory_space<vmem>>, %arg8: memref<32x1xf32, #tpu.memory_space<vmem>>) attributes {dimension_semantics = [#tpu.dimension_semantics<parallel>, #tpu.dimension_semantics<arbitrary>], iteration_bounds = array<i64: 2, 1>, scalar_prefetch = 0 : i64, scratch_operands = 1 : i64, tpu.core_type = #tpu.core_type<tc>, window_params = [{transform_indices = @transform_0, window_bounds = array<i64: 1, 32, 256>}, {pipeline_mode = #tpu.pipeline_mode<synchronous>, transform_indices = @transform_1, window_bounds = array<i64: 2, 32>}, {pipeline_mode = #tpu.pipeline_mode<synchronous>, transform_indices = @transform_2, window_bounds = array<i64: 2, 1>}, {pipeline_mode = #tpu.pipeline_mode<synchronous>, transform_indices = @transform_3, window_bounds = array<i64: 32, 2>}, {pipeline_mode = #tpu.pipeline_mode<synchronous>, transform_indices = @transform_4, window_bounds = array<i64: 32, 1>}, {transform_indices = @transform_5, window_bounds = array<i64: 1, 32, 256>}]} {
    %c0_i32 = arith.constant 0 : i32
    %0 = arith.cmpi eq, %arg1, %c0_i32 : i32
    %1 = arith.extui %0 : i1 to i32
    %c0_i32_0 = arith.constant 0 : i32
    %2 = arith.cmpi ne, %1, %c0_i32_0 : i32
    scf.if %2 {
      %cst_11 = arith.constant 0.000000e+00 : f32
      %19 = vector.broadcast %cst_11 : f32 to vector<32x1xf32>
      %c0_12 = arith.constant 0 : index
      %c0_13 = arith.constant 0 : index
      %20 = vector.load %arg8[%c0_12, %c0_13] : memref<32x1xf32, #tpu.memory_space<vmem>>, vector<32x1xf32>
      tpu.vector_store %arg8[%c0_12, %c0_13], %19 {strides = array<i32>} : memref<32x1xf32, #tpu.memory_space<vmem>>, vector<32x1xf32>,
    } else {
    }
    %c256_i32 = arith.constant 256 : i32
    %3 = arith.muli %arg1, %c256_i32 : i32
    %4 = tpu.assume_multiple %3, 128 : i32
    %c0 = arith.constant 0 : index
    %c0_1 = arith.constant 0 : index
    %c0_2 = arith.constant 0 : index
    %5 = vector.load %arg2[%c0, %c0_1, %c0_2] : memref<1x32x256xf32, #tpu.memory_space<vmem>>, vector<1x32x256xf32>
    %6 = vector.shape_cast %5 : vector<1x32x256xf32> to vector<32x256xf32>
    %c0_3 = arith.constant 0 : index
    %c0_4 = arith.constant 0 : index
    %7 = vector.load %arg8[%c0_3, %c0_4] : memref<32x1xf32, #tpu.memory_space<vmem>>, vector<32x1xf32>
    %cst = arith.constant dense<0.000000e+00> : vector<32xf32>
    %8 = vector.multi_reduction <add>, %6, %cst [1] : vector<32x256xf32> to vector<32xf32>
    %9 = vector.shape_cast %8 : vector<32xf32> to vector<32x1xf32>
    %10 = arith.addf %7, %9 : vector<32x1xf32>
    %c0_5 = arith.constant 0 : index
    %c0_6 = arith.constant 0 : index
    %11 = vector.load %arg8[%c0_5, %c0_6] : memref<32x1xf32, #tpu.memory_space<vmem>>, vector<32x1xf32>
    tpu.vector_store %arg8[%c0_5, %c0_6], %10 {strides = array<i32>} : memref<32x1xf32, #tpu.memory_space<vmem>>, vector<32x1xf32>,
    %c0_7 = arith.constant 0 : index
    %c0_8 = arith.constant 0 : index
    %12 = arith.index_cast %4 : i32 to index
    %13 = vector.load %arg7[%c0_7, %c0_8, %12] : memref<1x32x256xf32, #tpu.memory_space<vmem>>, vector<1x32x256xf32>
    %14 = vector.shape_cast %13 : vector<1x32x256xf32> to vector<32x256xf32>
    %15 = vector.shape_cast %6 : vector<32x256xf32> to vector<1x32x256xf32>
    tpu.vector_store %arg7[%c0_7, %c0_8, %12], %15 {strides = array<i32>} : memref<1x32x256xf32, #tpu.memory_space<vmem>>, vector<1x32x256xf32>,
    %c0_i32_9 = arith.constant 0 : i32
    %16 = arith.cmpi eq, %arg1, %c0_i32_9 : i32
    %17 = arith.extui %16 : i1 to i32
    %c0_i32_10 = arith.constant 0 : i32
    %18 = arith.cmpi ne, %17, %c0_i32_10 : i32
    scf.if %18 {
      %c0_11 = arith.constant 0 : index
      %c0_12 = arith.constant 0 : index
      %19 = vector.load %arg8[%c0_11, %c0_12] : memref<32x1xf32, #tpu.memory_space<vmem>>, vector<32x1xf32>
      %cst_13 = arith.constant 3.906250e-03 : f32
      %20 = vector.broadcast %cst_13 : f32 to vector<32x1xf32>
      %21 = arith.mulf %19, %20 : vector<32x1xf32>
      %c0_14 = arith.constant 0 : index
      %c0_15 = arith.constant 0 : index
      %22 = vector.load %arg3[%c0_14, %c0_15] : memref<2x32xf32, #tpu.memory_space<vmem>>, vector<2x32xf32>
      %cst_16 = arith.constant dense<0.000000e+00> : vector<2x1xf32>
      %23 = tpu.matmul %22, %21, %cst_16 {dimension_numbers = #tpu.dot_dimension_numbers<[1], [0], [0], [1], [0, 0, 1, 1], [], []>} : vector<2x32xf32>, vector<32x1xf32>, vector<2x1xf32> -> vector<2x1xf32>
      %c0_17 = arith.constant 0 : index
      %c0_18 = arith.constant 0 : index
      %24 = vector.load %arg4[%c0_17, %c0_18] : memref<2x1xf32, #tpu.memory_space<vmem>>, vector<2x1xf32>
      %25 = arith.addf %23, %24 : vector<2x1xf32>
      %cst_19 = arith.constant 0.000000e+00 : f32
      %26 = vector.broadcast %cst_19 : f32 to vector<2x1xf32>
      %27 = arith.maximumf %25, %26 : vector<2x1xf32>
      %c0_20 = arith.constant 0 : index
      %c0_21 = arith.constant 0 : index
      %28 = vector.load %arg5[%c0_20, %c0_21] : memref<32x2xf32, #tpu.memory_space<vmem>>, vector<32x2xf32>
      %cst_22 = arith.constant dense<0.000000e+00> : vector<32x1xf32>
      %29 = tpu.matmul %28, %27, %cst_22 {dimension_numbers = #tpu.dot_dimension_numbers<[1], [0], [0], [1], [0, 0, 1, 1], [], []>} : vector<32x2xf32>, vector<2x1xf32>, vector<32x1xf32> -> vector<32x1xf32>
      %c0_23 = arith.constant 0 : index
      %c0_24 = arith.constant 0 : index
      %30 = vector.load %arg6[%c0_23, %c0_24] : memref<32x1xf32, #tpu.memory_space<vmem>>, vector<32x1xf32>
      %31 = arith.addf %29, %30 : vector<32x1xf32>
      %32 = arith.negf %31 : vector<32x1xf32>
      %33 = math.exp %32 : vector<32x1xf32>
      %cst_25 = arith.constant 1.000000e+00 : f32
      %34 = vector.broadcast %cst_25 : f32 to vector<32x1xf32>
      %35 = arith.addf %34, %33 : vector<32x1xf32>
      %36 = arith.divf %34, %35 : vector<32x1xf32>
      %c0_26 = arith.constant 0 : index
      %c0_27 = arith.constant 0 : index
      %c0_28 = arith.constant 0 : index
      %37 = vector.load %arg7[%c0_26, %c0_27, %c0_28] : memref<1x32x256xf32, #tpu.memory_space<vmem>>, vector<1x32x256xf32>
      %38 = vector.shape_cast %37 : vector<1x32x256xf32> to vector<32x256xf32>
      %39 = vector.broadcast %36 : vector<32x1xf32> to vector<32x256xf32>
      %40 = arith.mulf %38, %39 : vector<32x256xf32>
      %c0_29 = arith.constant 0 : index
      %c0_30 = arith.constant 0 : index
      %c0_31 = arith.constant 0 : index
      %41 = vector.load %arg7[%c0_29, %c0_30, %c0_31] : memref<1x32x256xf32, #tpu.memory_space<vmem>>, vector<1x32x256xf32>
      %42 = vector.shape_cast %41 : vector<1x32x256xf32> to vector<32x256xf32>
      %43 = vector.shape_cast %40 : vector<32x256xf32> to vector<1x32x256xf32>
      tpu.vector_store %arg7[%c0_29, %c0_30, %c0_31], %43 {strides = array<i32>} : memref<1x32x256xf32, #tpu.memory_space<vmem>>, vector<1x32x256xf32>,
    } else {
    }
    return
  }
  func.func @transform_0(%arg0: i32, %arg1: i32) -> (i32, i32, i32) {
    %c0_i32 = arith.constant 0 : i32
    %c0_i32_0 = arith.constant 0 : i32
    return %arg0, %c0_i32, %arg1 : i32, i32, i32
  }
  func.func @transform_1(%arg0: i32, %arg1: i32) -> (i32, i32) {
    %c0_i32 = arith.constant 0 : i32
    %c0_i32_0 = arith.constant 0 : i32
    %c0_i32_1 = arith.constant 0 : i32
    return %c0_i32, %c0_i32_0 : i32, i32
  }
  func.func @transform_2(%arg0: i32, %arg1: i32) -> (i32, i32) {
    %c0_i32 = arith.constant 0 : i32
    %c0_i32_0 = arith.constant 0 : i32
    %c0_i32_1 = arith.constant 0 : i32
    return %c0_i32, %c0_i32_0 : i32, i32
  }
  func.func @transform_3(%arg0: i32, %arg1: i32) -> (i32, i32) {
    %c0_i32 = arith.constant 0 : i32
    %c0_i32_0 = arith.constant 0 : i32
    %c0_i32_1 = arith.constant 0 : i32
    return %c0_i32, %c0_i32_0 : i32, i32
  }
  func.func @transform_4(%arg0: i32, %arg1: i32) -> (i32, i32) {
    %c0_i32 = arith.constant 0 : i32
    %c0_i32_0 = arith.constant 0 : i32
    %c0_i32_1 = arith.constant 0 : i32
    return %c0_i32, %c0_i32_0 : i32, i32
  }
  func.func @transform_5(%arg0: i32, %arg1: i32) -> (i32, i32, i32) {
    %c0_i32 = arith.constant 0 : i32
    %c0_i32_0 = arith.constant 0 : i32
    %c0_i32_1 = arith.constant 0 : i32
    return %arg0, %c0_i32, %c0_i32_0 : i32, i32, i32
  }
}

</mosaic_0001>

<llo_original>
// kernel: tpu_custom_call.1
$region0: #{tpu_custom_call.1}
  #allocation0 [shape = 'u32[]', space=smem, size = 0x4, offset = 0x4, fixed_abs, tag = 'smem constant byte address 0x4 - core index']
  #allocation1 [shape = 'u32[144,128]{1,0:T(1,128)}', space=vmem, size = 0x12000, scoped, tag = 'internal scratch']
  #allocation2 [shape = 'f32[32,1]{1,0:T(8,128)}', space=vmem, size = 0x4000, scoped, tag = 'scratch operand']
  %s0 = inlined_call_operand.hbm [shape: f32[2,32,256], index: 0, kind: input, shape index: {}]
  %s1 = inlined_call_operand.vmem [shape: f32[2,32], index: 1, kind: input, shape index: {}]
  %s2 = inlined_call_operand.vmem [shape: f32[2,1], index: 2, kind: input, shape index: {}]
  %s3 = inlined_call_operand.vmem [shape: f32[32,2], index: 3, kind: input, shape index: {}]
  %s4 = inlined_call_operand.vmem [shape: f32[32,1], index: 4, kind: input, shape index: {}]
  %s5 = inlined_call_operand.hbm [shape: f32[2,32,256], index: 5, kind: output, shape index: {}]
  %s6 = sld [smem:[#allocation0]]
  $region65: #{tpu_custom_call.1} parent=0
    _
  %s8 = ssub.s32 1, %s6
  %s9 = scalar_select 0, %s8, %s6
  $region1: #{tpu_custom_call.1} parent=0
    #allocation3 [shape = 'u8[65536]{0}', space=vmem, size = 0x10000, scoped, tag = 'input window, operand 0']
    #allocation4 [shape = 's32[2]{0}', space=sflag, size = 0x8, scoped, tag = 'scoped memory for tpu_custom_call.1']
    #allocation5 [shape = 's32[2]{0}', space=sflag, size = 0x8, scoped, tag = 'scoped memory for tpu_custom_call.1']
    #allocation6 [shape = 'u8[65536]{0}', space=vmem, size = 0x10000, scoped, tag = 'output window, operand 0']
    %10 = vsyncpa [#allocation4], 0
    %s11 = scalar_lea.sflag [#allocation4], 1
    %12 = vsyncpa %s11, 0
    %13 = vsyncpa [#allocation5], 0
    %s14 = scalar_lea.sflag [#allocation5], 1
    %15 = vsyncpa %s14, 0
    loop: start=0, step=1, limit=4
    $region2: #{tpu_custom_call.1} parent=1 // loop_pre_header
      _
    $region3: #{tpu_custom_call.1} parent=1 // loop_header
      %s17 = sphi 0, %s21
      %p18 = scmp.ge.s32.totalorder %s17, 4
      %s24 = sphi 0, %s36
      %s25 = sphi 0, %s32
      %s26 = sphi 0, %s24
      %s27 = sphi 0, %s25
      %s28 = sphi 0, %s26
      %s29 = sphi 0, %s27
      %s41 = sphi 0, %s43
      %s44 = sphi 0, %s41
      %s45 = sphi 0, %s44
      %s61 = sphi 0, %s45
      %s65 = sphi 0, %s65
      %s67 = sphi 0, %s65
      %s68 = sphi 0, %s67
      %s82 = sphi 0, %s68
      %s86 = sphi 0, %s86
      %s88 = sphi 0, %s86
      %s89 = sphi 0, %s88
      %s103 = sphi 0, %s89
      %s107 = sphi 0, %s107
      %s109 = sphi 0, %s107
      %s110 = sphi 0, %s109
      %s124 = sphi 0, %s110
      %s128 = sphi 0, %s128
      %s130 = sphi 0, %s128
      %s131 = sphi 0, %s130
      %s145 = sphi 0, %s131
      %s151 = sphi 0, %s153
      %s154 = sphi 0, %s151
      %s155 = sphi 0, %s154
      %s171 = sphi 0, %s155
    $region4: #{tpu_custom_call.1} parent=1 // loop_header_branch
      %20 = sbr.rel (%p18) target = $region8
    $region5: #{tpu_custom_call.1} parent=1 // loop_body
      %s22 = ssub.s32 %s17, 1
      %s23 = ssub.s32 %s17, 2
      %s30 = sadd.s32 1, %s25
      %p31 = scmp.ge.s32.totalorder %s30, 1
      %s32 = scalar_select %p31, 0, %s30
      %s33 = sadd.s32 1, %s24
      %s34 = scalar_select %p31, %s33, %s24
      %p35 = scmp.ge.s32.totalorder %s34, 2
      %s36 = scalar_select %p35, 0, %s34
      %s37 = ssub.s32 %s24, %s36
      %s38 = ssub.s32 %s25, %s32
      %s39 = sor.u32 %s37, %s38
      %p40 = scmp.eq.s32.totalorder %s39, 0
      %s42 = sadd.s32 %s41, 1
      %s43 = scalar_select %p40, %s41, %s42
      %p46 = pneg %p40
      %p47 = scmp.eq.s32.totalorder %s17, 1
      %p48 = por %p46, %p47
      %p49 = scmp.ne.s32.totalorder %s41, %s44
      %p50 = scmp.eq.s32.totalorder %s17, 0
      %p51 = por %p49, %p50
      %p52 = scmp.ne.s32.totalorder %s41, %s44
      %p53 = scmp.eq.s32.totalorder %s22, 1
      %p54 = por %p52, %p53
      %p55 = scmp.ne.s32.totalorder %s44, %s45
      %p56 = scmp.eq.s32.totalorder %s22, 0
      %p57 = por %p55, %p56
      %p58 = scmp.ne.s32.totalorder %s44, %s45
      %p59 = scmp.eq.s32.totalorder %s23, 1
      %p60 = por %p58, %p59
      %p62 = scmp.ne.s32.totalorder %s45, %s61
      %p63 = scmp.eq.s32.totalorder %s23, 0
      %p64 = por %p62, %p63
      %s66 = sadd.s32 %s65, 1
      %p69 = scmp.eq.s32.totalorder %s17, 1
      %p70 = scmp.ne.s32.totalorder %s65, %s67
      %p71 = scmp.eq.s32.totalorder %s17, 0
      %p72 = por %p70, %p71
      %p73 = scmp.ne.s32.totalorder %s65, %s67
      %p74 = scmp.eq.s32.totalorder %s22, 1
      %p75 = por %p73, %p74
      %p76 = scmp.ne.s32.totalorder %s67, %s68
      %p77 = scmp.eq.s32.totalorder %s22, 0
      %p78 = por %p76, %p77
      %p79 = scmp.ne.s32.totalorder %s67, %s68
      %p80 = scmp.eq.s32.totalorder %s23, 1
      %p81 = por %p79, %p80
      %p83 = scmp.ne.s32.totalorder %s68, %s82
      %p84 = scmp.eq.s32.totalorder %s23, 0
      %p85 = por %p83, %p84
      %s87 = sadd.s32 %s86, 1
      %p90 = scmp.eq.s32.totalorder %s17, 1
      %p91 = scmp.ne.s32.totalorder %s86, %s88
      %p92 = scmp.eq.s32.totalorder %s17, 0
      %p93 = por %p91, %p92
      %p94 = scmp.ne.s32.totalorder %s86, %s88
      %p95 = scmp.eq.s32.totalorder %s22, 1
      %p96 = por %p94, %p95
      %p97 = scmp.ne.s32.totalorder %s88, %s89
      %p98 = scmp.eq.s32.totalorder %s22, 0
      %p99 = por %p97, %p98
      %p100 = scmp.ne.s32.totalorder %s88, %s89
      %p101 = scmp.eq.s32.totalorder %s23, 1
      %p102 = por %p100, %p101
      %p104 = scmp.ne.s32.totalorder %s89, %s103
      %p105 = scmp.eq.s32.totalorder %s23, 0
      %p106 = por %p104, %p105
      %s108 = sadd.s32 %s107, 1
      %p111 = scmp.eq.s32.totalorder %s17, 1
      %p112 = scmp.ne.s32.totalorder %s107, %s109
      %p113 = scmp.eq.s32.totalorder %s17, 0
      %p114 = por %p112, %p113
      %p115 = scmp.ne.s32.totalorder %s107, %s109
      %p116 = scmp.eq.s32.totalorder %s22, 1
      %p117 = por %p115, %p116
      %p118 = scmp.ne.s32.totalorder %s109, %s110
      %p119 = scmp.eq.s32.totalorder %s22, 0
      %p120 = por %p118, %p119
      %p121 = scmp.ne.s32.totalorder %s109, %s110
      %p122 = scmp.eq.s32.totalorder %s23, 1
      %p123 = por %p121, %p122
      %p125 = scmp.ne.s32.totalorder %s110, %s124
      %p126 = scmp.eq.s32.totalorder %s23, 0
      %p127 = por %p125, %p126
      %s129 = sadd.s32 %s128, 1
      %p132 = scmp.eq.s32.totalorder %s17, 1
      %p133 = scmp.ne.s32.totalorder %s128, %s130
      %p134 = scmp.eq.s32.totalorder %s17, 0
      %p135 = por %p133, %p134
      %p136 = scmp.ne.s32.totalorder %s128, %s130
      %p137 = scmp.eq.s32.totalorder %s22, 1
      %p138 = por %p136, %p137
      %p139 = scmp.ne.s32.totalorder %s130, %s131
      %p140 = scmp.eq.s32.totalorder %s22, 0
      %p141 = por %p139, %p140
      %p142 = scmp.ne.s32.totalorder %s130, %s131
      %p143 = scmp.eq.s32.totalorder %s23, 1
      %p144 = por %p142, %p143
      %p146 = scmp.ne.s32.totalorder %s131, %s145
      %p147 = scmp.eq.s32.totalorder %s23, 0
      %p148 = por %p146, %p147
      %s149 = ssub.s32 %s24, %s36
      %p150 = scmp.eq.s32.totalorder %s149, 0
      %s152 = sadd.s32 %s151, 1
      %s153 = scalar_select %p150, %s151, %s152
      %p156 = pneg %p150
      %p157 = scmp.eq.s32.totalorder %s17, 1
      %p158 = por %p156, %p157
      %p159 = scmp.ne.s32.totalorder %s151, %s154
      %p160 = scmp.eq.s32.totalorder %s17, 0
      %p161 = por %p159, %p160
      %p162 = scmp.ne.s32.totalorder %s151, %s154
      %p163 = scmp.eq.s32.totalorder %s22, 1
      %p164 = por %p162, %p163
      %p165 = scmp.ne.s32.totalorder %s154, %s155
      %p166 = scmp.eq.s32.totalorder %s22, 0
      %p167 = por %p165, %p166
      %p168 = scmp.ne.s32.totalorder %s154, %s155
      %p169 = scmp.eq.s32.totalorder %s23, 1
      %p170 = por %p168, %p169
      %p172 = scmp.ne.s32.totalorder %s155, %s171
      %p173 = scmp.eq.s32.totalorder %s23, 0
      %p174 = por %p172, %p173
      %p175 = scmp.le.s32.totalorder 1, %s17
      %p176 = scmp.lt.s32.totalorder %s17, 3
      %p177 = pnand %p175, %p176
      %p178 = pneg %p177
      // Predicated region
      $region9: #{tpu_custom_call.1} parent=5 // pred_check
        _
      $region10: #{tpu_custom_call.1} parent=5 // pred_check_branch
        %180 = sbr.rel (%p177) target = $region12
      $region11: #{tpu_custom_call.1} parent=5 // pred_region
        %s181 = ssub.s32 %s17, 1
        // Predicated region
        $region13: #{tpu_custom_call.1} parent=11 // pred_check
          %p182 = pneg %p78
        $region14: #{tpu_custom_call.1} parent=11 // pred_check_branch
          %184 = sbr.rel (%p182) target = $region16
        $region15: #{tpu_custom_call.1} parent=11 // pred_region
          _
        $region16: #{tpu_custom_call.1} parent=11 // pred_fallthru
          _
        // Predicated region
        $region17: #{tpu_custom_call.1} parent=11 // pred_check
          %p185 = pneg %p99
        $region18: #{tpu_custom_call.1} parent=11 // pred_check_branch
          %187 = sbr.rel (%p185) target = $region20
        $region19: #{tpu_custom_call.1} parent=11 // pred_region
          _
        $region20: #{tpu_custom_call.1} parent=11 // pred_fallthru
          _
        // Predicated region
        $region21: #{tpu_custom_call.1} parent=11 // pred_check
          %p188 = pneg %p120
        $region22: #{tpu_custom_call.1} parent=11 // pred_check_branch
          %190 = sbr.rel (%p188) target = $region24
        $region23: #{tpu_custom_call.1} parent=11 // pred_region
          _
        $region24: #{tpu_custom_call.1} parent=11 // pred_fallthru
          _
        // Predicated region
        $region25: #{tpu_custom_call.1} parent=11 // pred_check
          %p191 = pneg %p141
        $region26: #{tpu_custom_call.1} parent=11 // pred_check_branch
          %193 = sbr.rel (%p191) target = $region28
        $region27: #{tpu_custom_call.1} parent=11 // pred_region
          _
        $region28: #{tpu_custom_call.1} parent=11 // pred_fallthru
          _
      $region12: #{tpu_custom_call.1} parent=5 // pred_fallthru
        _
      %p194 = scmp.lt.s32.totalorder %s17, 2
      // Predicated region
      $region29: #{tpu_custom_call.1} parent=5 // pred_check
        %p195 = pneg %p194
      $region30: #{tpu_custom_call.1} parent=5 // pred_check_branch
        %197 = sbr.rel (%p195) target = $region32
      $region31: #{tpu_custom_call.1} parent=5 // pred_region
        // Predicated region
        $region33: #{tpu_custom_call.1} parent=31 // pred_check
          %p198 = pneg %p51
        $region34: #{tpu_custom_call.1} parent=31 // pred_check_branch
          %200 = sbr.rel (%p198) target = $region36
        $region35: #{tpu_custom_call.1} parent=31 // pred_region
          %s201 = sand.u32 %s41, 1
          %s202 = scalar_lea.sflag [#allocation4], %s201
          %s203 = sand.u32 %s41, 1
          %s204 = smul.addr %s203, 64
          %s205 = scalar_lea.vmem [#allocation3], %s204
          %s206 = smul.u32 2, %s25
          %s208 = ssub.s32 1024, 1024
          %209 = vsyncadd %s202, %s208
          %s210 = smul.addr %s24, 8
          %s211 = sadd.s32 %s206, %s210
          %s212 = smul.addr %s211, 128
          %s213 = scalar_lea.hbm %s0, %s212
          %s214 = sshll.u32 %s205, 4
          %s215 = int_to_ptr.vmem [resolvable:$true] %s214
          %220 = dma.hbm_to_vmem [thread:$0]  %s213, 1024, %s215, %s202, 256, 256, 16
        $region36: #{tpu_custom_call.1} parent=31 // pred_fallthru
          _
      $region32: #{tpu_custom_call.1} parent=5 // pred_fallthru
        _
      %p221 = scmp.le.s32.totalorder 1, %s17
      %p222 = scmp.lt.s32.totalorder %s17, 3
      %p223 = pnand %p221, %p222
      %p224 = pneg %p223
      // Predicated region
      $region37: #{tpu_custom_call.1} parent=5 // pred_check
        _
      $region38: #{tpu_custom_call.1} parent=5 // pred_check_branch
        %226 = sbr.rel (%p223) target = $region40
      $region39: #{tpu_custom_call.1} parent=5 // pred_region
        %s227 = ssub.s32 %s17, 1
        %s228 = sand.u32 %s44, 1
        %s229 = scalar_lea.sflag [#allocation4], %s228
        %s230 = sand.u32 %s44, 1
        %s231 = smul.addr %s230, 64
        %s232 = scalar_lea.vmem [#allocation3], %s231
        // Predicated region
        $region41: #{tpu_custom_call.1} parent=39 // pred_check
          %p233 = pneg %p57
        $region42: #{tpu_custom_call.1} parent=39 // pred_check_branch
          %235 = sbr.rel (%p233) target = $region44
        $region43: #{tpu_custom_call.1} parent=39 // pred_region
          %236 = dma.done %s229, 1024
        $region44: #{tpu_custom_call.1} parent=39 // pred_fallthru
          _
        %s237 = sand.u32 %s44, 1
        %s238 = scalar_lea.sflag [#allocation4], %s237
        %s239 = sand.u32 %s44, 1
        %s240 = smul.addr %s239, 64
        %s241 = scalar_lea.vmem [#allocation3], %s240
        %p242 = pneg %p57
        %p243 = pneg %p54
        %p244 = pneg %p78
        %p245 = pneg %p75
        %p246 = pneg %p99
        %p247 = pneg %p96
        %p248 = pneg %p120
        %p249 = pneg %p117
        %p250 = pneg %p141
        %p251 = pneg %p138
        %p252 = pneg %p167
        %p253 = pneg %p164
        %s254 = sand.u32 %s154, 1
        %s255 = scalar_lea.sflag [#allocation5], %s254
        %s256 = sand.u32 %s154, 1
        %s257 = smul.addr %s256, 64
        %s258 = scalar_lea.vmem [#allocation6], %s257
        %s259 = smul.u32 2, %s27
        %p260 = scmp.eq.s32.totalorder %s27, 0
        // Predicated region
        $region45: #{tpu_custom_call.1} parent=39 // pred_check
          %p261 = pneg %p260
        $region46: #{tpu_custom_call.1} parent=39 // pred_check_branch
          %263 = sbr.rel (%p261) target = $region48
        $region47: #{tpu_custom_call.1} parent=39 // pred_region
          %vm264 = vcmask 7168
          %265 = vst.msk [vmem:[#allocation2] sm:$0xff] %vm264, 0.0
          %266 = vst.msk [vmem:[#allocation2 + $0x8] sm:$0xff] %vm264, 0.0
          %267 = vst.msk [vmem:[#allocation2 + $0x10] sm:$0xff] %vm264, 0.0
          %268 = vst.msk [vmem:[#allocation2 + $0x18] sm:$0xff] %vm264, 0.0
        $region48: #{tpu_custom_call.1} parent=39 // pred_fallthru
          _
        %s269 = smul.u32 %s27, 256
        %v270 = vld [vmem:[%s232] sm:$0xff]
        %v271 = vld [vmem:[%s232 + $0x8] sm:$0xff]
        %v272 = vld [vmem:[%s232 + $0x10] sm:$0xff]
        %v273 = vld [vmem:[%s232 + $0x18] sm:$0xff]
        %v274 = vld [vmem:[%s232 + $0x20] sm:$0xff]
        %v275 = vld [vmem:[%s232 + $0x28] sm:$0xff]
        %v276 = vld [vmem:[%s232 + $0x30] sm:$0xff]
        %v277 = vld [vmem:[%s232 + $0x38] sm:$0xff]
        %v278 = vld [vmem:[#allocation2] sm:$0xff]
        %v279 = vld [vmem:[#allocation2 + $0x8] sm:$0xff]
        %v280 = vld [vmem:[#allocation2 + $0x10] sm:$0xff]
        %v281 = vld [vmem:[#allocation2 + $0x18] sm:$0xff]
        %v282 = vadd.f32 %v270, %v271
        %283 = vadd.xlane.f32.xlu0 %v282
        %v284 = vpop.xlane.xlu0 %283
        %v285 = vadd.f32 %v272, %v273
        %286 = vadd.xlane.f32.xlu0 %v285
        %v287 = vpop.xlane.xlu0 %286
        %v288 = vadd.f32 %v274, %v275
        %289 = vadd.xlane.f32.xlu0 %v288
        %v290 = vpop.xlane.xlu0 %289
        %v291 = vadd.f32 %v276, %v277
        %292 = vadd.xlane.f32.xlu0 %v291
        %v293 = vpop.xlane.xlu0 %292
        %v294 = vadd.f32 %v278, %v284
        %v295 = vadd.f32 %v279, %v287
        %v296 = vadd.f32 %v280, %v290
        %v297 = vadd.f32 %v281, %v293
        %vm298 = vcmask 7168
        %299 = vst.msk [vmem:[#allocation2] sm:$0xff] %vm298, %v294
        %300 = vst.msk [vmem:[#allocation2 + $0x8] sm:$0xff] %vm298, %v295
        %301 = vst.msk [vmem:[#allocation2 + $0x10] sm:$0xff] %vm298, %v296
        %302 = vst.msk [vmem:[#allocation2 + $0x18] sm:$0xff] %vm298, %v297
        %s303 = sshra.s32 %s269, 7
        %s304 = sand.u32 %s269, 127
        %s305 = smul.addr %s303, 8
        %s306 = scalar_lea.vmem %s258, %s305 [#allocation6]
        %307 = vst [vmem:[%s306] sm:$0xff] %v270
        %308 = vst [vmem:[%s306 + $0x8] sm:$0xff] %v271
        %309 = vst [vmem:[%s306 + $0x10] sm:$0xff] %v272
        %310 = vst [vmem:[%s306 + $0x18] sm:$0xff] %v273
        %311 = vst [vmem:[%s306 + $0x20] sm:$0xff] %v274
        %312 = vst [vmem:[%s306 + $0x28] sm:$0xff] %v275
        %313 = vst [vmem:[%s306 + $0x30] sm:$0xff] %v276
        %314 = vst [vmem:[%s306 + $0x38] sm:$0xff] %v277
        // Predicated region
        $region49: #{tpu_custom_call.1} parent=39 // pred_check
          %p315 = pneg %p260
        $region50: #{tpu_custom_call.1} parent=39 // pred_check_branch
          %317 = sbr.rel (%p315) target = $region52
        $region51: #{tpu_custom_call.1} parent=39 // pred_region
          %v318 = vld [vmem:[#allocation2] sm:$0xff]
          %v319 = vld [vmem:[#allocation2 + $0x8] sm:$0xff]
          %v320 = vld [vmem:[#allocation2 + $0x10] sm:$0xff]
          %v321 = vld [vmem:[#allocation2 + $0x18] sm:$0xff]
          %v322 = vmul.f32 %v318, 0.00390625
          %v323 = vmul.f32 %v319, 0.00390625
          %v324 = vmul.f32 %v320, 0.00390625
          %v325 = vmul.f32 %v321, 0.00390625
          %v326 = vld [vmem:[%s1] sm:$0x3]
          %v327 = vld [vmem:[%s2] sm:$0x3]
          %vm328 = vcmask 261120
          %v330 = vsel %vm328, %v326, 0
          %332 = vmatprep.subr.mxu0 0.0
          %333 = vmatpush1.msra.mxu0 %v322
          %334 = vmatprep.subr.mxu0 0.0
          %335 = vmatpush1.msra.mxu0 %v323
          %336 = vmatprep.subr.mxu0 0.0
          %337 = vmatpush1.msra.mxu0 %v324
          %338 = vmatprep.subr.mxu0 0.0
          %339 = vmatpush1.msra.mxu0 %v325
          %340 = vmatprep.subr.mxu0 0.0
          %341 = vmatpush1.msra.mxu0 0.0
          %342 = vmatprep.subr.mxu0 0.0
          %343 = vmatpush1.msra.mxu0 0.0
          %344 = vmatprep.subr.mxu0 0.0
          %345 = vmatpush1.msra.mxu0 0.0
          %346 = vmatprep.subr.mxu0 0.0
          %347 = vmatpush1.msra.mxu0 0.0
          %348 = vmatprep.subr.mxu0 0.0
          %349 = vmatpush1.msra.mxu0 0.0
          %350 = vmatprep.subr.mxu0 0.0
          %351 = vmatpush1.msra.mxu0 0.0
          %352 = vmatprep.subr.mxu0 0.0
          %353 = vmatpush1.msra.mxu0 0.0
          %354 = vmatprep.subr.mxu0 0.0
          %355 = vmatpush1.msra.mxu0 0.0
          %356 = vmatprep.subr.mxu0 0.0
          %357 = vmatpush1.msra.mxu0 0.0
          %358 = vmatprep.subr.mxu0 0.0
          %359 = vmatpush1.msra.mxu0 0.0
          %360 = vmatprep.subr.mxu0 0.0
          %361 = vmatpush1.msra.mxu0 0.0
          %362 = vmatprep.subr.mxu0 0.0
          %363 = vmatpush1.msra.mxu0 0.0
          %364 = vmatprep.subr.mxu0 0.0
          %365 = vmatpush1.msra.mxu0 0.0
          %366 = vmatprep.subr.mxu0 0.0
          %367 = vmatpush1.msra.mxu0 0.0
          %368 = vmatprep.subr.mxu0 0.0
          %369 = vmatpush1.msra.mxu0 0.0
          %370 = vmatprep.subr.mxu0 0.0
          %371 = vmatpush1.msra.mxu0 0.0
          %372 = vmatprep.subr.mxu0 0.0
          %373 = vmatpush1.msra.mxu0 0.0
          %374 = vmatprep.subr.mxu0 0.0
          %375 = vmatpush1.msra.mxu0 0.0
          %376 = vmatprep.subr.mxu0 0.0
          %377 = vmatpush1.msra.mxu0 0.0
          %378 = vmatprep.subr.mxu0 0.0
          %379 = vmatpush1.msra.mxu0 0.0
          %380 = vmatprep.subr.mxu0 0.0
          %381 = vmatpush1.msra.mxu0 0.0
          %382 = vmatprep.subr.mxu0 0.0
          %383 = vmatpush1.msra.mxu0 0.0
          %384 = vmatprep.subr.mxu0 0.0
          %385 = vmatpush1.msra.mxu0 0.0
          %386 = vmatprep.subr.mxu0 0.0
          %387 = vmatpush1.msra.mxu0 0.0
          %388 = vmatprep.subr.mxu0 0.0
          %389 = vmatpush1.msra.mxu0 0.0
          %390 = vmatprep.subr.mxu0 0.0
          %391 = vmatpush1.msra.mxu0 0.0
          %392 = vmatprep.subr.mxu0 0.0
          %393 = vmatpush1.msra.mxu0 0.0
          %394 = vmatprep.subr.mxu0 0.0
          %395 = vmatpush1.msra.mxu0 0.0
          %396 = vmatprep.mubr.f32.mxu0 0.0
          %397 = vmatmul.mubr.f32.gmra.mrb[0].mxu0 %v330
          %v398 = vpop.f32.mrb[0].mxu0
          %v399 = vadd.f32 %v327, %v398
          %v400 = vpop.f32.mrb[0].mxu0
          %401 = vdwg.mxu0
          %v402 = vmax.f32 %v399, 0.0
          %v403 = vld [vmem:[%s3] sm:$0xff]
          %v404 = vld [vmem:[%s3 + $0x8] sm:$0xff]
          %v405 = vld [vmem:[%s3 + $0x10] sm:$0xff]
          %v406 = vld [vmem:[%s3 + $0x18] sm:$0xff]
          %v407 = vld [vmem:[%s4] sm:$0xff]
          %v408 = vld [vmem:[%s4 + $0x8] sm:$0xff]
          %v409 = vld [vmem:[%s4 + $0x10] sm:$0xff]
          %v410 = vld [vmem:[%s4 + $0x18] sm:$0xff]
          %vm411 = vcmask 15360
          %v413 = vsel %vm411, %v403, 0
          %v416 = vsel %vm411, %v404, 0
          %v419 = vsel %vm411, %v405, 0
          %v422 = vsel %vm411, %v406, 0
          %vm424 = vcmask 1041408
          %v426 = vsel %vm424, %v402, 0
          %428 = vmatprep.subr.mxu0 0.0
          %429 = vmatpush1.msra.mxu0 %v426
          %430 = vmatprep.subr.mxu0 0.0
          %431 = vmatpush1.msra.mxu0 0.0
          %432 = vmatprep.subr.mxu0 0.0
          %433 = vmatpush1.msra.mxu0 0.0
          %434 = vmatprep.subr.mxu0 0.0
          %435 = vmatpush1.msra.mxu0 0.0
          %436 = vmatprep.subr.mxu0 0.0
          %437 = vmatpush1.msra.mxu0 0.0
          %438 = vmatprep.subr.mxu0 0.0
          %439 = vmatpush1.msra.mxu0 0.0
          %440 = vmatprep.subr.mxu0 0.0
          %441 = vmatpush1.msra.mxu0 0.0
          %442 = vmatprep.subr.mxu0 0.0
          %443 = vmatpush1.msra.mxu0 0.0
          %444 = vmatprep.subr.mxu0 0.0
          %445 = vmatpush1.msra.mxu0 0.0
          %446 = vmatprep.subr.mxu0 0.0
          %447 = vmatpush1.msra.mxu0 0.0
          %448 = vmatprep.subr.mxu0 0.0
          %449 = vmatpush1.msra.mxu0 0.0
          %450 = vmatprep.subr.mxu0 0.0
          %451 = vmatpush1.msra.mxu0 0.0
          %452 = vmatprep.subr.mxu0 0.0
          %453 = vmatpush1.msra.mxu0 0.0
          %454 = vmatprep.subr.mxu0 0.0
          %455 = vmatpush1.msra.mxu0 0.0
          %456 = vmatprep.subr.mxu0 0.0
          %457 = vmatpush1.msra.mxu0 0.0
          %458 = vmatprep.subr.mxu0 0.0
          %459 = vmatpush1.msra.mxu0 0.0
          %460 = vmatprep.subr.mxu0 0.0
          %461 = vmatpush1.msra.mxu0 0.0
          %462 = vmatprep.subr.mxu0 0.0
          %463 = vmatpush1.msra.mxu0 0.0
          %464 = vmatprep.subr.mxu0 0.0
          %465 = vmatpush1.msra.mxu0 0.0
          %466 = vmatprep.subr.mxu0 0.0
          %467 = vmatpush1.msra.mxu0 0.0
          %468 = vmatprep.subr.mxu0 0.0
          %469 = vmatpush1.msra.mxu0 0.0
          %470 = vmatprep.subr.mxu0 0.0
          %471 = vmatpush1.msra.mxu0 0.0
          %472 = vmatprep.subr.mxu0 0.0
          %473 = vmatpush1.msra.mxu0 0.0
          %474 = vmatprep.subr.mxu0 0.0
          %475 = vmatpush1.msra.mxu0 0.0
          %476 = vmatprep.subr.mxu0 0.0
          %477 = vmatpush1.msra.mxu0 0.0
          %478 = vmatprep.subr.mxu0 0.0
          %479 = vmatpush1.msra.mxu0 0.0
          %480 = vmatprep.subr.mxu0 0.0
          %481 = vmatpush1.msra.mxu0 0.0
          %482 = vmatprep.subr.mxu0 0.0
          %483 = vmatpush1.msra.mxu0 0.0
          %484 = vmatprep.subr.mxu0 0.0
          %485 = vmatpush1.msra.mxu0 0.0
          %486 = vmatprep.subr.mxu0 0.0
          %487 = vmatpush1.msra.mxu0 0.0
          %488 = vmatprep.subr.mxu0 0.0
          %489 = vmatpush1.msra.mxu0 0.0
          %490 = vmatprep.subr.mxu0 0.0
          %491 = vmatpush1.msra.mxu0 0.0
          %492 = vmatprep.mubr.f32.mxu0 0.0
          %493 = vmatmul.mubr.f32.gmra.mrb[0].mxu0 %v413
          %v494 = vpop.f32.mrb[0].mxu0
          %v495 = vadd.f32 %v407, %v494
          %v496 = vpop.f32.mrb[0].mxu0
          %497 = vmatprep.mubr.f32.mxu0 0.0
          %498 = vmatmul.mubr.f32.gmra.mrb[0].mxu0 %v416
          %v499 = vpop.f32.mrb[0].mxu0
          %v500 = vadd.f32 %v408, %v499
          %v501 = vpop.f32.mrb[0].mxu0
          %502 = vmatprep.mubr.f32.mxu0 0.0
          %503 = vmatmul.mubr.f32.gmra.mrb[0].mxu0 %v419
          %v504 = vpop.f32.mrb[0].mxu0
          %v505 = vadd.f32 %v409, %v504
          %v506 = vpop.f32.mrb[0].mxu0
          %507 = vmatprep.mubr.f32.mxu0 0.0
          %508 = vmatmul.mubr.f32.gmra.mrb[0].mxu0 %v422
          %v509 = vpop.f32.mrb[0].mxu0
          %v510 = vadd.f32 %v410, %v509
          %v511 = vpop.f32.mrb[0].mxu0
          %512 = vdwg.mxu0
          %v513 = vxor.u32 %v495, 2147483648
          %v514 = vxor.u32 %v500, 2147483648
          %v515 = vxor.u32 %v505, 2147483648
          %v516 = vxor.u32 %v510, 2147483648
          %v517 = vmul.f32 %v513, 1.442695
          %v518 = vpow.pop %v517
          %v519 = vmul.f32 %v514, 1.442695
          %v520 = vpow.pop %v519
          %v521 = vmul.f32 %v515, 1.442695
          %v522 = vpow.pop %v521
          %v523 = vmul.f32 %v516, 1.442695
          %v524 = vpow.pop %v523
          %v525 = vadd.f32 %v518, 1.0
          %v526 = vadd.f32 %v520, 1.0
          %v527 = vadd.f32 %v522, 1.0
          %v528 = vadd.f32 %v524, 1.0
          %v529 = vrcp.pop %v525
          %v530 = vmul.f32 1.0, %v529
          %v531 = vrcp.pop %v526
          %v532 = vmul.f32 1.0, %v531
          %v533 = vrcp.pop %v527
          %v534 = vmul.f32 1.0, %v533
          %v535 = vrcp.pop %v528
          %v536 = vmul.f32 1.0, %v535
          %v537 = vld [vmem:[%s258] sm:$0xff]
          %v538 = vld [vmem:[%s258 + $0x8] sm:$0xff]
          %v539 = vld [vmem:[%s258 + $0x10] sm:$0xff]
          %v540 = vld [vmem:[%s258 + $0x18] sm:$0xff]
          %v541 = vld [vmem:[%s258 + $0x20] sm:$0xff]
          %v542 = vld [vmem:[%s258 + $0x28] sm:$0xff]
          %v543 = vld [vmem:[%s258 + $0x30] sm:$0xff]
          %v544 = vld [vmem:[%s258 + $0x38] sm:$0xff]
          %546 = vset.pattern.permute.xlu0 0
          %547 = vperm.xlu0 %546, %v530
          %v548 = vpop.permute.xlu0 %547
          %551 = vset.pattern.permute.xlu0 0
          %552 = vperm.xlu0 %551, %v532
          %v553 = vpop.permute.xlu0 %552
          %556 = vset.pattern.permute.xlu0 0
          %557 = vperm.xlu0 %556, %v534
          %v558 = vpop.permute.xlu0 %557
          %561 = vset.pattern.permute.xlu0 0
          %562 = vperm.xlu0 %561, %v536
          %v563 = vpop.permute.xlu0 %562
          %v565 = vmul.f32 %v537, %v548
          %v566 = vmul.f32 %v538, %v548
          %v567 = vmul.f32 %v539, %v553
          %v568 = vmul.f32 %v540, %v553
          %v569 = vmul.f32 %v541, %v558
          %v570 = vmul.f32 %v542, %v558
          %v571 = vmul.f32 %v543, %v563
          %v572 = vmul.f32 %v544, %v563
          %573 = vst [vmem:[%s258] sm:$0xff] %v565
          %574 = vst [vmem:[%s258 + $0x8] sm:$0xff] %v566
          %575 = vst [vmem:[%s258 + $0x10] sm:$0xff] %v567
          %576 = vst [vmem:[%s258 + $0x18] sm:$0xff] %v568
          %577 = vst [vmem:[%s258 + $0x20] sm:$0xff] %v569
          %578 = vst [vmem:[%s258 + $0x28] sm:$0xff] %v570
          %579 = vst [vmem:[%s258 + $0x30] sm:$0xff] %v571
          %580 = vst [vmem:[%s258 + $0x38] sm:$0xff] %v572
        $region52: #{tpu_custom_call.1} parent=39 // pred_fallthru
          _
        %s581 = sand.u32 %s154, 1
        %s582 = scalar_lea.sflag [#allocation5], %s581
        %s583 = sand.u32 %s154, 1
        %s584 = smul.addr %s583, 64
        %s585 = scalar_lea.vmem [#allocation6], %s584
        // Predicated region
        $region53: #{tpu_custom_call.1} parent=39 // pred_check
          %p586 = pneg %p164
        $region54: #{tpu_custom_call.1} parent=39 // pred_check_branch
          %588 = sbr.rel (%p586) target = $region56
        $region55: #{tpu_custom_call.1} parent=39 // pred_region
          %s590 = ssub.s32 1024, 1024
          %591 = vsyncadd %s582, %s590
          %s592 = smul.addr %s26, 8
          %s593 = smul.addr %s592, 128
          %s594 = scalar_lea.hbm %s5, %s593
          %s595 = sshll.u32 %s585, 4
          %s596 = int_to_ptr.vmem [resolvable:$true] %s595
          %601 = dma.vmem_to_hbm [thread:$0]  %s596, 1024, %s594, %s582, 256, 256, 16
        $region56: #{tpu_custom_call.1} parent=39 // pred_fallthru
          _
      $region40: #{tpu_custom_call.1} parent=5 // pred_fallthru
        _
      %p602 = scmp.le.s32.totalorder 2, %s17
      // Predicated region
      $region57: #{tpu_custom_call.1} parent=5 // pred_check
        %p603 = pneg %p602
      $region58: #{tpu_custom_call.1} parent=5 // pred_check_branch
        %605 = sbr.rel (%p603) target = $region60
      $region59: #{tpu_custom_call.1} parent=5 // pred_region
        %s606 = ssub.s32 %s17, 2
        // Predicated region
        $region61: #{tpu_custom_call.1} parent=59 // pred_check
          %p607 = pneg %p170
        $region62: #{tpu_custom_call.1} parent=59 // pred_check_branch
          %609 = sbr.rel (%p607) target = $region64
        $region63: #{tpu_custom_call.1} parent=59 // pred_region
          %s610 = sand.u32 %s155, 1
          %s611 = scalar_lea.sflag [#allocation5], %s610
          %s612 = sand.u32 %s155, 1
          %s613 = smul.addr %s612, 64
          %s614 = scalar_lea.vmem [#allocation6], %s613
          %615 = dma.done %s611, 1024
        $region64: #{tpu_custom_call.1} parent=59 // pred_fallthru
          _
      $region60: #{tpu_custom_call.1} parent=5 // pred_fallthru
        _
    $region6: #{tpu_custom_call.1} parent=1 // loop_footer
      %s21 = sadd.s32 1, %s17
    $region7: #{tpu_custom_call.1} parent=1 // loop_footer_branch
      %16 = sbr.rel target = $region3
    $region8: #{tpu_custom_call.1} parent=1 // loop_exit
      _
    %616 = vsyncpa [#allocation4], 1
    %s617 = scalar_lea.sflag [#allocation4], 1
    %618 = vsyncpa %s617, 1
    %619 = vsyncpa [#allocation5], 1
    %s620 = scalar_lea.sflag [#allocation5], 1
    %621 = vsyncpa %s620, 1

</llo_original>
